<compile_context>
chip_gen: v5e
topology: v5e:2x2
jax: 0.10.0
libtpu: 0.0.40
codegen_flags: <defaults>
</compile_context>

<pallas_src>
import jax
import jax.numpy as jnp
from jax.experimental import pallas as pl
from jax.experimental.pallas import tpu as pltpu


LANE = 128
SUBLANE = 8


def glycolysis_kernel(y_ref, o_ref):
    # Model constants (glycolysis.__init__), baked in at compile time.
    J0 = 2.5
    k1 = 100.0
    k2 = 6.0
    k3 = 16.0
    k4 = 100.0
    k5 = 1.28
    k6 = 12.0
    k = 1.8
    kappa = 13.0
    K1 = 0.52
    psi = 0.1
    N = 1.0
    A = 4.0
    # q = 4.0 applied below as an exact integer power (repeated squaring).

    # Full (TR, 128) lane-dense slabs per species.
    S1 = y_ref[0]
    S2 = y_ref[1]
    S3 = y_ref[2]
    S4 = y_ref[3]
    S5 = y_ref[4]
    S6 = y_ref[5]
    S7 = y_ref[6]

    r = S6 * (1.0 / K1)                 # S6 / K1 via constant reciprocal
    r2 = r * r
    r_q = r2 * r2                       # (S6 / K1) ** 4.0
    inv = pl.reciprocal(1.0 + r_q, approx=False)   # EUP-path reciprocal

    flux1 = (k1 * S1) * S6 * inv        # shared PFK flux term
    v2 = k2 * S2 * (N - S5)
    v3 = k3 * S3 * (A - S6)
    v4 = k4 * S4 * S5
    v6 = k6 * S2 * S5
    vexch = kappa * (S4 - S7)

    # Full-slab, lane-dense stores.
    o_ref[0] = J0 - flux1
    o_ref[1] = 2.0 * flux1 - v2 - v6
    o_ref[2] = v2 - v3
    o_ref[3] = v3 - v4 - vexch
    o_ref[4] = v2 - v4 - v6
    o_ref[5] = -2.0 * flux1 + 2.0 * v3 - k5 * S6
    o_ref[6] = psi * vexch - k * S7


def glycolysis_rhs_species_major(y_sm):
    """RHS on species-major state.

    y_sm: (7, R, 128) float32 with R % 8 == 0.  Returns dy in the same layout.
    This is the layout an ODE solver should keep its state in to avoid
    per-step transposes entirely.
    """
    seven, R, lane = y_sm.shape
    assert seven == 7 and lane == LANE and R % SUBLANE == 0, y_sm.shape

    # Largest row-tile (multiple of 8, capped at 256) dividing R.  Cap keeps
    # double-buffered in+out blocks (~3.5 MiB worst case) far under scoped
    # VMEM on every generation; large tiles amortize per-step overhead.
    TR = next(t for t in (256, 128, 64, 32, 16, 8) if R % t == 0)
    grid = (R // TR,)

    n_elems = R * LANE                  # padded batch size
    cost = pl.CostEstimate(
        flops=40 * n_elems,             # ~40 VPU flops per batch element
        transcendentals=0,
        bytes_accessed=2 * 7 * 4 * n_elems,
    )

    return pl.pallas_call(
        glycolysis_kernel,
        out_shape=jax.ShapeDtypeStruct((7, R, LANE), jnp.float32),
        grid=grid,
        in_specs=[pl.BlockSpec((7, TR, LANE), lambda i: (0, i, 0))],
        out_specs=pl.BlockSpec((7, TR, LANE), lambda i: (0, i, 0)),
        compiler_params=pltpu.CompilerParams(
            dimension_semantics=("parallel",),
        ),
        cost_estimate=cost,
    )(y_sm)


def glycolysis_forward(t, y):
    """Drop-in mirror of glycolysis.forward(t, y): y.view(-1, 7) -> (B, 7).

    The layout conversion below is a one-time boundary cost for torch-shape
    compatibility; a solver loop should use glycolysis_rhs_species_major
    directly on resident (7, R, 128) state (no per-evaluation transposes).
    """
    del t  # unused in the reference forward
    y2 = jnp.reshape(y, (-1, 7))        # torch's y.view(-1, 7)
    B = y2.shape[0]
    in_dtype = y2.dtype

    rows = -(-B // LANE)                                   # cdiv(B, 128)
    R = max(SUBLANE, -(-rows // SUBLANE) * SUBLANE)        # pad rows to mult of 8
    B_pad = R * LANE

    # Zero padding is safe: S6 = 0 -> denom = 1, all padded outputs finite.
    y_pad = jnp.zeros((B_pad, 7), jnp.float32).at[:B].set(y2.astype(jnp.float32))
    y_sm = y_pad.T.reshape(7, R, LANE)                     # boundary conversion

    d_sm = glycolysis_rhs_species_major(y_sm)

    d = d_sm.reshape(7, B_pad).T[:B]                       # back to (B, 7)
    return d.astype(in_dtype)


def _reference_forward(t, y):
    """Plain-JAX reference used only for the correctness check."""
    del t
    y2 = jnp.reshape(y, (-1, 7))
    S1, S2, S3, S4, S5, S6, S7 = [y2[:, i] for i in range(7)]
    J0, k1, k2, k3, k4, k5, k6 = 2.5, 100.0, 6.0, 16.0, 100.0, 1.28, 12.0
    k, kappa, q, K1, psi, N, A = 1.8, 13.0, 4.0, 0.52, 0.1, 1.0, 4.0
    denom = 1.0 + (S6 / K1) ** q
    dS1 = J0 - k1 * S1 * S6 / denom
    dS2 = 2.0 * (k1 * S1 * S6) / denom - k2 * S2 * (N - S5) - k6 * S2 * S5
    dS3 = k2 * S2 * (N - S5) - k3 * S3 * (A - S6)
    dS4 = k3 * S3 * (A - S6) - k4 * S4 * S5 - kappa * (S4 - S7)
    dS5 = k2 * S2 * (N - S5) - k4 * S4 * S5 - k6 * S2 * S5
    dS6 = -2.0 * (k1 * S1 * S6) / denom + 2.0 * k3 * S3 * (A - S6) - k5 * S6
    dS7 = psi * kappa * (S4 - S7) - k * S7
    return jnp.stack([dS1, dS2, dS3, dS4, dS5, dS6, dS7], axis=1)


if __name__ == "__main__":
    key = jax.random.PRNGKey(0)
    B = 256  # small batch; padded internally to a (7, R, 128) species-major slab
    # Positive "concentration-like" states (the ODE's intended domain).
    y = jax.random.uniform(key, (B, 7), dtype=jnp.float32, minval=0.1, maxval=2.0)
    t = jnp.float32(0.0)

    out = glycolysis_forward(t, y)
    out = jax.block_until_ready(out)

    ref = _reference_forward(t, y)
    assert out.shape == (B, 7) and out.dtype == jnp.float32
    assert bool(jnp.allclose(out, ref, rtol=1e-5, atol=1e-5)), "mismatch vs reference"
    print("KERNEL_OK")
</pallas_src>

<mosaic_0001>
module attributes {stable_mosaic.version = 11 : i64} {
  func.func @glycolysis_kernel(%arg0: i32, %arg1: memref<7x8x128xf32, #tpu.memory_space<vmem>>, %arg2: memref<7x8x128xf32, #tpu.memory_space<vmem>>) attributes {dimension_semantics = [#tpu.dimension_semantics<parallel>], iteration_bounds = array<i64: 1>, scalar_prefetch = 0 : i64, scratch_operands = 0 : i64, tpu.core_type = #tpu.core_type<tc>, window_params = [{transform_indices = @transform_0, window_bounds = array<i64: 7, 8, 128>}, {transform_indices = @transform_1, window_bounds = array<i64: 7, 8, 128>}]} {
    %c0 = arith.constant 0 : index
    %c0_0 = arith.constant 0 : index
    %c0_1 = arith.constant 0 : index
    %0 = vector.load %arg1[%c0, %c0_0, %c0_1] : memref<7x8x128xf32, #tpu.memory_space<vmem>>, vector<1x8x128xf32>
    %1 = vector.shape_cast %0 : vector<1x8x128xf32> to vector<8x128xf32>
    %c1 = arith.constant 1 : index
    %c0_2 = arith.constant 0 : index
    %c0_3 = arith.constant 0 : index
    %2 = vector.load %arg1[%c1, %c0_2, %c0_3] : memref<7x8x128xf32, #tpu.memory_space<vmem>>, vector<1x8x128xf32>
    %3 = vector.shape_cast %2 : vector<1x8x128xf32> to vector<8x128xf32>
    %c2 = arith.constant 2 : index
    %c0_4 = arith.constant 0 : index
    %c0_5 = arith.constant 0 : index
    %4 = vector.load %arg1[%c2, %c0_4, %c0_5] : memref<7x8x128xf32, #tpu.memory_space<vmem>>, vector<1x8x128xf32>
    %5 = vector.shape_cast %4 : vector<1x8x128xf32> to vector<8x128xf32>
    %c3 = arith.constant 3 : index
    %c0_6 = arith.constant 0 : index
    %c0_7 = arith.constant 0 : index
    %6 = vector.load %arg1[%c3, %c0_6, %c0_7] : memref<7x8x128xf32, #tpu.memory_space<vmem>>, vector<1x8x128xf32>
    %7 = vector.shape_cast %6 : vector<1x8x128xf32> to vector<8x128xf32>
    %c4 = arith.constant 4 : index
    %c0_8 = arith.constant 0 : index
    %c0_9 = arith.constant 0 : index
    %8 = vector.load %arg1[%c4, %c0_8, %c0_9] : memref<7x8x128xf32, #tpu.memory_space<vmem>>, vector<1x8x128xf32>
    %9 = vector.shape_cast %8 : vector<1x8x128xf32> to vector<8x128xf32>
    %c5 = arith.constant 5 : index
    %c0_10 = arith.constant 0 : index
    %c0_11 = arith.constant 0 : index
    %10 = vector.load %arg1[%c5, %c0_10, %c0_11] : memref<7x8x128xf32, #tpu.memory_space<vmem>>, vector<1x8x128xf32>
    %11 = vector.shape_cast %10 : vector<1x8x128xf32> to vector<8x128xf32>
    %c6 = arith.constant 6 : index
    %c0_12 = arith.constant 0 : index
    %c0_13 = arith.constant 0 : index
    %12 = vector.load %arg1[%c6, %c0_12, %c0_13] : memref<7x8x128xf32, #tpu.memory_space<vmem>>, vector<1x8x128xf32>
    %13 = vector.shape_cast %12 : vector<1x8x128xf32> to vector<8x128xf32>
    %cst = arith.constant 1.92307687 : f32
    %14 = vector.broadcast %cst : f32 to vector<8x128xf32>
    %15 = arith.mulf %11, %14 : vector<8x128xf32>
    %16 = arith.mulf %15, %15 : vector<8x128xf32>
    %17 = arith.mulf %16, %16 : vector<8x128xf32>
    %cst_14 = arith.constant 1.000000e+00 : f32
    %18 = vector.broadcast %cst_14 : f32 to vector<8x128xf32>
    %19 = arith.addf %18, %17 : vector<8x128xf32>
    %20 = tpu.reciprocal %19 : vector<8x128xf32> -> vector<8x128xf32>
    %cst_15 = arith.constant 1.000000e+02 : f32
    %21 = vector.broadcast %cst_15 : f32 to vector<8x128xf32>
    %22 = arith.mulf %21, %1 : vector<8x128xf32>
    %23 = arith.mulf %22, %11 : vector<8x128xf32>
    %24 = arith.mulf %23, %20 : vector<8x128xf32>
    %cst_16 = arith.constant 6.000000e+00 : f32
    %25 = vector.broadcast %cst_16 : f32 to vector<8x128xf32>
    %26 = arith.mulf %25, %3 : vector<8x128xf32>
    %cst_17 = arith.constant 1.000000e+00 : f32
    %27 = vector.broadcast %cst_17 : f32 to vector<8x128xf32>
    %28 = arith.subf %27, %9 : vector<8x128xf32>
    %29 = arith.mulf %26, %28 : vector<8x128xf32>
    %cst_18 = arith.constant 1.600000e+01 : f32
    %30 = vector.broadcast %cst_18 : f32 to vector<8x128xf32>
    %31 = arith.mulf %30, %5 : vector<8x128xf32>
    %cst_19 = arith.constant 4.000000e+00 : f32
    %32 = vector.broadcast %cst_19 : f32 to vector<8x128xf32>
    %33 = arith.subf %32, %11 : vector<8x128xf32>
    %34 = arith.mulf %31, %33 : vector<8x128xf32>
    %cst_20 = arith.constant 1.000000e+02 : f32
    %35 = vector.broadcast %cst_20 : f32 to vector<8x128xf32>
    %36 = arith.mulf %35, %7 : vector<8x128xf32>
    %37 = arith.mulf %36, %9 : vector<8x128xf32>
    %cst_21 = arith.constant 1.200000e+01 : f32
    %38 = vector.broadcast %cst_21 : f32 to vector<8x128xf32>
    %39 = arith.mulf %38, %3 : vector<8x128xf32>
    %40 = arith.mulf %39, %9 : vector<8x128xf32>
    %41 = arith.subf %7, %13 : vector<8x128xf32>
    %cst_22 = arith.constant 1.300000e+01 : f32
    %42 = vector.broadcast %cst_22 : f32 to vector<8x128xf32>
    %43 = arith.mulf %42, %41 : vector<8x128xf32>
    %cst_23 = arith.constant 2.500000e+00 : f32
    %44 = vector.broadcast %cst_23 : f32 to vector<8x128xf32>
    %45 = arith.subf %44, %24 : vector<8x128xf32>
    %c0_24 = arith.constant 0 : index
    %c0_25 = arith.constant 0 : index
    %c0_26 = arith.constant 0 : index
    %46 = vector.load %arg2[%c0_24, %c0_25, %c0_26] : memref<7x8x128xf32, #tpu.memory_space<vmem>>, vector<1x8x128xf32>
    %47 = vector.shape_cast %46 : vector<1x8x128xf32> to vector<8x128xf32>
    %48 = vector.shape_cast %45 : vector<8x128xf32> to vector<1x8x128xf32>
    tpu.vector_store %arg2[%c0_24, %c0_25, %c0_26], %48 {strides = array<i32>} : memref<7x8x128xf32, #tpu.memory_space<vmem>>, vector<1x8x128xf32>,
    %cst_27 = arith.constant 2.000000e+00 : f32
    %49 = vector.broadcast %cst_27 : f32 to vector<8x128xf32>
    %50 = arith.mulf %49, %24 : vector<8x128xf32>
    %51 = arith.subf %50, %29 : vector<8x128xf32>
    %52 = arith.subf %51, %40 : vector<8x128xf32>
    %c1_28 = arith.constant 1 : index
    %c0_29 = arith.constant 0 : index
    %c0_30 = arith.constant 0 : index
    %53 = vector.load %arg2[%c1_28, %c0_29, %c0_30] : memref<7x8x128xf32, #tpu.memory_space<vmem>>, vector<1x8x128xf32>
    %54 = vector.shape_cast %53 : vector<1x8x128xf32> to vector<8x128xf32>
    %55 = vector.shape_cast %52 : vector<8x128xf32> to vector<1x8x128xf32>
    tpu.vector_store %arg2[%c1_28, %c0_29, %c0_30], %55 {strides = array<i32>} : memref<7x8x128xf32, #tpu.memory_space<vmem>>, vector<1x8x128xf32>,
    %56 = arith.subf %29, %34 : vector<8x128xf32>
    %c2_31 = arith.constant 2 : index
    %c0_32 = arith.constant 0 : index
    %c0_33 = arith.constant 0 : index
    %57 = vector.load %arg2[%c2_31, %c0_32, %c0_33] : memref<7x8x128xf32, #tpu.memory_space<vmem>>, vector<1x8x128xf32>
    %58 = vector.shape_cast %57 : vector<1x8x128xf32> to vector<8x128xf32>
    %59 = vector.shape_cast %56 : vector<8x128xf32> to vector<1x8x128xf32>
    tpu.vector_store %arg2[%c2_31, %c0_32, %c0_33], %59 {strides = array<i32>} : memref<7x8x128xf32, #tpu.memory_space<vmem>>, vector<1x8x128xf32>,
    %60 = arith.subf %34, %37 : vector<8x128xf32>
    %61 = arith.subf %60, %43 : vector<8x128xf32>
    %c3_34 = arith.constant 3 : index
    %c0_35 = arith.constant 0 : index
    %c0_36 = arith.constant 0 : index
    %62 = vector.load %arg2[%c3_34, %c0_35, %c0_36] : memref<7x8x128xf32, #tpu.memory_space<vmem>>, vector<1x8x128xf32>
    %63 = vector.shape_cast %62 : vector<1x8x128xf32> to vector<8x128xf32>
    %64 = vector.shape_cast %61 : vector<8x128xf32> to vector<1x8x128xf32>
    tpu.vector_store %arg2[%c3_34, %c0_35, %c0_36], %64 {strides = array<i32>} : memref<7x8x128xf32, #tpu.memory_space<vmem>>, vector<1x8x128xf32>,
    %65 = arith.subf %29, %37 : vector<8x128xf32>
    %66 = arith.subf %65, %40 : vector<8x128xf32>
    %c4_37 = arith.constant 4 : index
    %c0_38 = arith.constant 0 : index
    %c0_39 = arith.constant 0 : index
    %67 = vector.load %arg2[%c4_37, %c0_38, %c0_39] : memref<7x8x128xf32, #tpu.memory_space<vmem>>, vector<1x8x128xf32>
    %68 = vector.shape_cast %67 : vector<1x8x128xf32> to vector<8x128xf32>
    %69 = vector.shape_cast %66 : vector<8x128xf32> to vector<1x8x128xf32>
    tpu.vector_store %arg2[%c4_37, %c0_38, %c0_39], %69 {strides = array<i32>} : memref<7x8x128xf32, #tpu.memory_space<vmem>>, vector<1x8x128xf32>,
    %cst_40 = arith.constant -2.000000e+00 : f32
    %70 = vector.broadcast %cst_40 : f32 to vector<8x128xf32>
    %71 = arith.mulf %70, %24 : vector<8x128xf32>
    %cst_41 = arith.constant 2.000000e+00 : f32
    %72 = vector.broadcast %cst_41 : f32 to vector<8x128xf32>
    %73 = arith.mulf %72, %34 : vector<8x128xf32>
    %74 = arith.addf %71, %73 : vector<8x128xf32>
    %cst_42 = arith.constant 1.280000e+00 : f32
    %75 = vector.broadcast %cst_42 : f32 to vector<8x128xf32>
    %76 = arith.mulf %75, %11 : vector<8x128xf32>
    %77 = arith.subf %74, %76 : vector<8x128xf32>
    %c5_43 = arith.constant 5 : index
    %c0_44 = arith.constant 0 : index
    %c0_45 = arith.constant 0 : index
    %78 = vector.load %arg2[%c5_43, %c0_44, %c0_45] : memref<7x8x128xf32, #tpu.memory_space<vmem>>, vector<1x8x128xf32>
    %79 = vector.shape_cast %78 : vector<1x8x128xf32> to vector<8x128xf32>
    %80 = vector.shape_cast %77 : vector<8x128xf32> to vector<1x8x128xf32>
    tpu.vector_store %arg2[%c5_43, %c0_44, %c0_45], %80 {strides = array<i32>} : memref<7x8x128xf32, #tpu.memory_space<vmem>>, vector<1x8x128xf32>,
    %cst_46 = arith.constant 1.000000e-01 : f32
    %81 = vector.broadcast %cst_46 : f32 to vector<8x128xf32>
    %82 = arith.mulf %81, %43 : vector<8x128xf32>
    %cst_47 = arith.constant 1.800000e+00 : f32
    %83 = vector.broadcast %cst_47 : f32 to vector<8x128xf32>
    %84 = arith.mulf %83, %13 : vector<8x128xf32>
    %85 = arith.subf %82, %84 : vector<8x128xf32>
    %c6_48 = arith.constant 6 : index
    %c0_49 = arith.constant 0 : index
    %c0_50 = arith.constant 0 : index
    %86 = vector.load %arg2[%c6_48, %c0_49, %c0_50] : memref<7x8x128xf32, #tpu.memory_space<vmem>>, vector<1x8x128xf32>
    %87 = vector.shape_cast %86 : vector<1x8x128xf32> to vector<8x128xf32>
    %88 = vector.shape_cast %85 : vector<8x128xf32> to vector<1x8x128xf32>
    tpu.vector_store %arg2[%c6_48, %c0_49, %c0_50], %88 {strides = array<i32>} : memref<7x8x128xf32, #tpu.memory_space<vmem>>, vector<1x8x128xf32>,
    return
  }
  func.func @transform_0(%arg0: i32) -> (i32, i32, i32) {
    %c0_i32 = arith.constant 0 : i32
    %c0_i32_0 = arith.constant 0 : i32
    %c0_i32_1 = arith.constant 0 : i32
    return %c0_i32, %arg0, %c0_i32_0 : i32, i32, i32
  }
  func.func @transform_1(%arg0: i32) -> (i32, i32, i32) {
    %c0_i32 = arith.constant 0 : i32
    %c0_i32_0 = arith.constant 0 : i32
    %c0_i32_1 = arith.constant 0 : i32
    return %c0_i32, %arg0, %c0_i32_0 : i32, i32, i32
  }
}

</mosaic_0001>

<llo_original>
// kernel: tpu_custom_call.1
$region0: #{tpu_custom_call.1}
  #allocation0 [shape = 'u32[]', space=smem, size = 0x4, offset = 0x4, fixed_abs, tag = 'smem constant byte address 0x4 - core index']
  #allocation1 [shape = 'u32[72,128]{1,0:T(1,128)}', space=vmem, size = 0x9000, scoped, tag = 'internal scratch']
  %s0 = inlined_call_operand.hbm [shape: f32[7,8,128], index: 0, kind: input, shape index: {}]
  %s1 = inlined_call_operand.hbm [shape: f32[7,8,128], index: 1, kind: output, shape index: {}]
  %s2 = sld [smem:[#allocation0]]
  $region18: #{tpu_custom_call.1} parent=0
    _
  %s4 = ssub.s32 1, %s2
  %s5 = scalar_select 0, %s4, %s2
  $region1: #{tpu_custom_call.1} parent=0
    #allocation2 [shape = 'u8[28672]{0}', space=vmem, size = 0x7000, scoped, tag = 'input window, operand 0, single buffered']
    #allocation3 [shape = 's32[1]{0}', space=sflag, size = 0x4, scoped, tag = 'scoped memory for tpu_custom_call.1']
    #allocation4 [shape = 's32[1]{0}', space=sflag, size = 0x4, scoped, tag = 'scoped memory for tpu_custom_call.1']
    #allocation5 [shape = 'u8[28672]{0}', space=vmem, size = 0x7000, scoped, tag = 'output window, operand 0, single buffered']
    %6 = vsyncpa [#allocation3], 0
    %7 = vsyncpa [#allocation4], 0
    // Predicated region
    $region2: #{tpu_custom_call.1} parent=1 // pred_check
      _
    $region3: #{tpu_custom_call.1} parent=1 // pred_check_branch
      %9 = sbr.rel (0) target = $region5
    $region4: #{tpu_custom_call.1} parent=1 // pred_region
      %11 = vsyncadd [#allocation3], 0
      %s12 = sshll.u32 %s0, 4
      %s13 = int_to_ptr.hbm [resolvable:$true] %s12
      %s14 = sshll.u32 [#allocation2], 4
      %s15 = int_to_ptr.vmem [resolvable:$true] %s14
      %20 = dma.hbm_to_vmem [thread:$0]  %s13, 896, %s15, [#allocation3], 128, 128, 8
    $region5: #{tpu_custom_call.1} parent=1 // pred_fallthru
      _
    // Predicated region
    $region6: #{tpu_custom_call.1} parent=1 // pred_check
      _
    $region7: #{tpu_custom_call.1} parent=1 // pred_check_branch
      %22 = sbr.rel (0) target = $region9
    $region8: #{tpu_custom_call.1} parent=1 // pred_region
      %24 = dma.done [#allocation3], 896
    $region9: #{tpu_custom_call.1} parent=1 // pred_fallthru
      _
    %v25 = vld [vmem:[#allocation2] sm:$0xff]
    %s26 = scalar_lea.vmem [#allocation2], 8
    %v27 = vld [vmem:[%s26] sm:$0xff]
    %s28 = scalar_lea.vmem [#allocation2], 16
    %v29 = vld [vmem:[%s28] sm:$0xff]
    %s30 = scalar_lea.vmem [#allocation2], 24
    %v31 = vld [vmem:[%s30] sm:$0xff]
    %s32 = scalar_lea.vmem [#allocation2], 32
    %v33 = vld [vmem:[%s32] sm:$0xff]
    %s34 = scalar_lea.vmem [#allocation2], 40
    %v35 = vld [vmem:[%s34] sm:$0xff]
    %s36 = scalar_lea.vmem [#allocation2], 48
    %v37 = vld [vmem:[%s36] sm:$0xff]
    %v38 = vmul.f32 %v35, 1.9230769
    %v39 = vmul.f32 %v38, %v38
    %v40 = vmul.f32 %v39, %v39
    %v41 = vadd.f32 %v40, 1.0
    %v42 = vrcp.pop %v41
    %v43 = vmul.f32 %v41, %v42
    %v44 = vsub.f32 1.0, %v43
    %v45 = vmul.f32 %v42, %v44
    %v46 = vadd.f32 %v42, %v45
    %vm47 = vweird.f32 %v41
    %vm48 = vweird.f32 %v42
    %vm49 = vmor %vm47, %vm48
    %v50 = vsel %vm49, %v42, %v46
    %v51 = vand.u32 2147483647, %v41
    %vm52 = vcmp.eq.f32.partialorder %v51, 8.507059e+37
    %v53 = vand.u32 %v41, 2147483648
    %v54 = vor.u32 1.1754944e-38, %v53
    %v55 = vsel %vm52, %v54, %v50
    %v56 = vmul.f32 %v25, 100.0
    %v57 = vmul.f32 %v56, %v35
    %v58 = vmul.f32 %v57, %v55
    %v59 = vmul.f32 %v27, 6.0
    %v60 = vsub.f32 1.0, %v33
    %v61 = vmul.f32 %v59, %v60
    %v62 = vmul.f32 %v29, 16.0
    %v63 = vsub.f32 4.0, %v35
    %v64 = vmul.f32 %v62, %v63
    %v65 = vmul.f32 %v31, 100.0
    %v66 = vmul.f32 %v65, %v33
    %v67 = vmul.f32 %v27, 12.0
    %v68 = vmul.f32 %v67, %v33
    %v69 = vsub.f32 %v31, %v37
    %v70 = vmul.f32 %v69, 13.0
    %v71 = vsub.f32 2.5, %v58
    %72 = vst [vmem:[#allocation5] sm:$0xff] %v71
    %v73 = vmul.f32 %v58, 2.0
    %v74 = vsub.f32 %v73, %v61
    %v75 = vsub.f32 %v74, %v68
    %s76 = scalar_lea.vmem [#allocation5], 8
    %77 = vst [vmem:[%s76] sm:$0xff] %v75
    %v78 = vsub.f32 %v61, %v64
    %s79 = scalar_lea.vmem [#allocation5], 16
    %80 = vst [vmem:[%s79] sm:$0xff] %v78
    %v81 = vsub.f32 %v64, %v66
    %v82 = vsub.f32 %v81, %v70
    %s83 = scalar_lea.vmem [#allocation5], 24
    %84 = vst [vmem:[%s83] sm:$0xff] %v82
    %v85 = vsub.f32 %v61, %v66
    %v86 = vsub.f32 %v85, %v68
    %s87 = scalar_lea.vmem [#allocation5], 32
    %88 = vst [vmem:[%s87] sm:$0xff] %v86
    %v89 = vmul.f32 %v58, -2.0
    %v90 = vmul.f32 %v64, 2.0
    %v91 = vadd.f32 %v89, %v90
    %v92 = vmul.f32 %v35, 1.28
    %v93 = vsub.f32 %v91, %v92
    %s94 = scalar_lea.vmem [#allocation5], 40
    %95 = vst [vmem:[%s94] sm:$0xff] %v93
    %v96 = vmul.f32 %v70, 0.1
    %v97 = vmul.f32 %v37, 1.8
    %v98 = vsub.f32 %v96, %v97
    %s99 = scalar_lea.vmem [#allocation5], 48
    %100 = vst [vmem:[%s99] sm:$0xff] %v98
    // Predicated region
    $region10: #{tpu_custom_call.1} parent=1 // pred_check
      _
    $region11: #{tpu_custom_call.1} parent=1 // pred_check_branch
      %102 = sbr.rel (0) target = $region13
    $region12: #{tpu_custom_call.1} parent=1 // pred_region
      %104 = vsyncadd [#allocation4], 0
      %s105 = sshll.u32 [#allocation5], 4
      %s106 = int_to_ptr.vmem [resolvable:$true] %s105
      %s107 = sshll.u32 %s1, 4
      %s108 = int_to_ptr.hbm [resolvable:$true] %s107
      %113 = dma.vmem_to_hbm [thread:$0]  %s106, 896, %s108, [#allocation4], 128, 128, 8
    $region13: #{tpu_custom_call.1} parent=1 // pred_fallthru
      _
    // Predicated region
    $region14: #{tpu_custom_call.1} parent=1 // pred_check
      _
    $region15: #{tpu_custom_call.1} parent=1 // pred_check_branch
      %115 = sbr.rel (0) target = $region17
    $region16: #{tpu_custom_call.1} parent=1 // pred_region
      %117 = dma.done [#allocation4], 896
    $region17: #{tpu_custom_call.1} parent=1 // pred_fallthru
      _
    %118 = vsyncpa [#allocation3], 1
    %119 = vsyncpa [#allocation4], 1

</llo_original>
